<compile_context>
chip_gen: v5e
topology: v5e:2x2
jax: 0.10.0
libtpu: 0.0.40
codegen_flags: <defaults>
</compile_context>

<pallas_src>
import functools

import jax
import jax.numpy as jnp
from jax.experimental import pallas as pl
from jax.experimental.pallas import tpu as pltpu


def _basis_rotation_kernel(n_batch, x_ref, r_ref, out_ref):
    # r_ref:   (C_in, M, M)    = R[o]   for this grid step's output channel o
    # x_ref:   (N, C_in, M, M) = full input (constant index map -> resident)
    # out_ref: (N, M, M)       = out[:, o]
    r = r_ref[...]                                            # (C_in, M, M)

    # Static loop over the (tiny) batch; each iteration is two c-batched MXU
    # matmuls + a VPU reduction over c.
    # TODO(synk): make N a "parallel" grid axis at production batch sizes.
    for n in range(n_batch):
        xn = x_ref[n]                                         # (C_in, M, M)
        # s[c, i, k] = sum_j R[o, c, i, j] * x[n, c, j, k]
        s = jnp.einsum("cij,cjk->cik", r, xn,
                       preferred_element_type=jnp.float32)
        # y[c, i, l] = sum_k s[c, i, k] * R[o, c, l, k]      (the R^T side;
        # the transpose lives in the einsum spec, not in a relayout)
        y = jnp.einsum("cik,clk->cil", s, r,
                       preferred_element_type=jnp.float32)
        out_ref[n] = jnp.sum(y, axis=0).astype(out_ref.dtype)


def basis_rotation(x, R):
    """x: [N, C_in, M, M], R: [C_out, C_in, M, M] -> [N, C_out, M, M] (float32)."""
    n, c_in, m, m2 = x.shape
    c_out, c_in_r, mr, mr2 = R.shape
    assert m == m2 == mr == mr2 and c_in == c_in_r

    dt = jnp.float32
    xf = x.astype(dt)   # raw operands, no layout plumbing
    rf = R.astype(dt)

    # Flops the kernel actually executes: two M^3 matmuls per (n, o, c).
    flops = 4 * n * c_out * c_in * m ** 3
    bytes_accessed = 4 * (xf.size + rf.size + n * c_out * m * m)

    kernel = functools.partial(_basis_rotation_kernel, n)

    return pl.pallas_call(
        kernel,
        out_shape=jax.ShapeDtypeStruct((n, c_out, m, m), dt),
        grid_spec=pltpu.PrefetchScalarGridSpec(
            num_scalar_prefetch=0,
            grid=(c_out,),                       # independent axis -> parallel
            in_specs=[
                # Full x: constant block index -> DMA'd once, VMEM-resident.
                pl.BlockSpec((n, c_in, m, m), lambda o: (0, 0, 0, 0)),
                # This step's output-channel slice of R (4 KiB per step).
                pl.BlockSpec((None, c_in, m, m), lambda o: (o, 0, 0, 0)),
            ],
            # Written directly in (N, C_out, M, M) order -> no wrapper post-ops.
            out_specs=pl.BlockSpec((n, None, m, m), lambda o: (0, o, 0, 0)),
        ),
        compiler_params=pltpu.CompilerParams(
            dimension_semantics=("parallel",),   # shards C_out over v7x's 2 TCs
            vmem_limit_bytes=32 * 1024 * 1024,   # explicit budget; usage << 1 MiB here
        ),
        cost_estimate=pl.CostEstimate(
            flops=flops, transcendentals=0, bytes_accessed=bytes_accessed),
    )(xf, rf)


def basis_rotation_ref(x, R):
    # sum_c R[o,c] @ x[n,c] @ R[o,c]^T
    return jnp.einsum("ocij,ncjk,oclk->noil", R, x, R)


if __name__ == "__main__":
    # Shapes implied by the module: input [N, C_in, M, M], R [C_out, C_in, M, M]
    N, C_IN, C_OUT, M = 2, 4, 3, 16

    key = jax.random.PRNGKey(0)
    kx, kr = jax.random.split(key)

    x = jax.random.normal(kx, (N, C_IN, M, M), dtype=jnp.float32)

    # Deterministic parameter init matching __init__:
    #   R = c * rand(...) with c = 1 / (C_out * C_in * M)
    scale = 1.0 / (C_OUT * C_IN * M)
    R = scale * jax.random.uniform(kr, (C_OUT, C_IN, M, M), dtype=jnp.float32)

    out = basis_rotation(x, R)
    out = jax.block_until_ready(out)

    ref = basis_rotation_ref(x, R)
    assert out.shape == (N, C_OUT, M, M)
    assert jnp.allclose(out, ref, atol=1e-5, rtol=1e-5)

    print("KERNEL_OK")
</pallas_src>

<mosaic_0001>
module attributes {stable_mosaic.version = 11 : i64} {
  func.func @_basis_rotation_kernel(%arg0: i32, %arg1: memref<2x4x16x16xf32, #tpu.memory_space<vmem>>, %arg2: memref<1x4x16x16xf32, #tpu.memory_space<vmem>>, %arg3: memref<2x1x16x16xf32, #tpu.memory_space<vmem>>) attributes {dimension_semantics = [#tpu.dimension_semantics<parallel>], iteration_bounds = array<i64: 3>, scalar_prefetch = 0 : i64, scratch_operands = 0 : i64, tpu.core_type = #tpu.core_type<tc>, window_params = [{pipeline_mode = #tpu.pipeline_mode<synchronous>, transform_indices = @transform_0, window_bounds = array<i64: 2, 4, 16, 16>}, {transform_indices = @transform_1, window_bounds = array<i64: 1, 4, 16, 16>}, {transform_indices = @transform_2, window_bounds = array<i64: 2, 1, 16, 16>}]} {
    %c0 = arith.constant 0 : index
    %c0_0 = arith.constant 0 : index
    %c0_1 = arith.constant 0 : index
    %c0_2 = arith.constant 0 : index
    %0 = vector.load %arg2[%c0, %c0_0, %c0_1, %c0_2] : memref<1x4x16x16xf32, #tpu.memory_space<vmem>>, vector<1x4x16x16xf32>
    %1 = vector.shape_cast %0 : vector<1x4x16x16xf32> to vector<4x16x16xf32>
    %c0_3 = arith.constant 0 : index
    %c0_4 = arith.constant 0 : index
    %c0_5 = arith.constant 0 : index
    %c0_6 = arith.constant 0 : index
    %2 = vector.load %arg1[%c0_3, %c0_4, %c0_5, %c0_6] : memref<2x4x16x16xf32, #tpu.memory_space<vmem>>, vector<1x4x16x16xf32>
    %3 = vector.shape_cast %2 : vector<1x4x16x16xf32> to vector<4x16x16xf32>
    "tpu.trace_start"() <{level = 10 : i32, message = "cij,cjk->cik"}> : () -> ()
    %cst = arith.constant dense<0.000000e+00> : vector<4x16x16xf32>
    %4 = tpu.matmul %1, %3, %cst {dimension_numbers = #tpu.dot_dimension_numbers<[2], [1], [1], [2], [0, 0, 0, 1, 1, 2], [0], [0]>} : vector<4x16x16xf32>, vector<4x16x16xf32>, vector<4x16x16xf32> -> vector<4x16x16xf32>
    "tpu.trace_stop"() : () -> ()
    "tpu.trace_start"() <{level = 10 : i32, message = "cik,clk->cil"}> : () -> ()
    %cst_7 = arith.constant dense<0.000000e+00> : vector<4x16x16xf32>
    %5 = tpu.matmul %4, %1, %cst_7 {dimension_numbers = #tpu.dot_dimension_numbers<[2], [2], [1], [1], [0, 0, 0, 1, 1, 1], [0], [0]>} : vector<4x16x16xf32>, vector<4x16x16xf32>, vector<4x16x16xf32> -> vector<4x16x16xf32>
    "tpu.trace_stop"() : () -> ()
    %cst_8 = arith.constant dense<0.000000e+00> : vector<16x16xf32>
    %6 = vector.multi_reduction <add>, %5, %cst_8 [0] : vector<4x16x16xf32> to vector<16x16xf32>
    %c0_9 = arith.constant 0 : index
    %c0_10 = arith.constant 0 : index
    %c0_11 = arith.constant 0 : index
    %c0_12 = arith.constant 0 : index
    %7 = vector.load %arg3[%c0_9, %c0_10, %c0_11, %c0_12] : memref<2x1x16x16xf32, #tpu.memory_space<vmem>>, vector<1x1x16x16xf32>
    %8 = vector.shape_cast %7 : vector<1x1x16x16xf32> to vector<16x16xf32>
    %9 = vector.shape_cast %6 : vector<16x16xf32> to vector<1x1x16x16xf32>
    tpu.vector_store %arg3[%c0_9, %c0_10, %c0_11, %c0_12], %9 {strides = array<i32>} : memref<2x1x16x16xf32, #tpu.memory_space<vmem>>, vector<1x1x16x16xf32>,
    %c1 = arith.constant 1 : index
    %c0_13 = arith.constant 0 : index
    %c0_14 = arith.constant 0 : index
    %c0_15 = arith.constant 0 : index
    %10 = vector.load %arg1[%c1, %c0_13, %c0_14, %c0_15] : memref<2x4x16x16xf32, #tpu.memory_space<vmem>>, vector<1x4x16x16xf32>
    %11 = vector.shape_cast %10 : vector<1x4x16x16xf32> to vector<4x16x16xf32>
    "tpu.trace_start"() <{level = 10 : i32, message = "cij,cjk->cik"}> : () -> ()
    %cst_16 = arith.constant dense<0.000000e+00> : vector<4x16x16xf32>
    %12 = tpu.matmul %1, %11, %cst_16 {dimension_numbers = #tpu.dot_dimension_numbers<[2], [1], [1], [2], [0, 0, 0, 1, 1, 2], [0], [0]>} : vector<4x16x16xf32>, vector<4x16x16xf32>, vector<4x16x16xf32> -> vector<4x16x16xf32>
    "tpu.trace_stop"() : () -> ()
    "tpu.trace_start"() <{level = 10 : i32, message = "cik,clk->cil"}> : () -> ()
    %cst_17 = arith.constant dense<0.000000e+00> : vector<4x16x16xf32>
    %13 = tpu.matmul %12, %1, %cst_17 {dimension_numbers = #tpu.dot_dimension_numbers<[2], [2], [1], [1], [0, 0, 0, 1, 1, 1], [0], [0]>} : vector<4x16x16xf32>, vector<4x16x16xf32>, vector<4x16x16xf32> -> vector<4x16x16xf32>
    "tpu.trace_stop"() : () -> ()
    %cst_18 = arith.constant dense<0.000000e+00> : vector<16x16xf32>
    %14 = vector.multi_reduction <add>, %13, %cst_18 [0] : vector<4x16x16xf32> to vector<16x16xf32>
    %c1_19 = arith.constant 1 : index
    %c0_20 = arith.constant 0 : index
    %c0_21 = arith.constant 0 : index
    %c0_22 = arith.constant 0 : index
    %15 = vector.load %arg3[%c1_19, %c0_20, %c0_21, %c0_22] : memref<2x1x16x16xf32, #tpu.memory_space<vmem>>, vector<1x1x16x16xf32>
    %16 = vector.shape_cast %15 : vector<1x1x16x16xf32> to vector<16x16xf32>
    %17 = vector.shape_cast %14 : vector<16x16xf32> to vector<1x1x16x16xf32>
    tpu.vector_store %arg3[%c1_19, %c0_20, %c0_21, %c0_22], %17 {strides = array<i32>} : memref<2x1x16x16xf32, #tpu.memory_space<vmem>>, vector<1x1x16x16xf32>,
    return
  }
  func.func @transform_0(%arg0: i32) -> (i32, i32, i32, i32) {
    %c0_i32 = arith.constant 0 : i32
    %c0_i32_0 = arith.constant 0 : i32
    %c0_i32_1 = arith.constant 0 : i32
    %c0_i32_2 = arith.constant 0 : i32
    %c0_i32_3 = arith.constant 0 : i32
    return %c0_i32, %c0_i32_0, %c0_i32_1, %c0_i32_2 : i32, i32, i32, i32
  }
  func.func @transform_1(%arg0: i32) -> (i32, i32, i32, i32) {
    %c0_i32 = arith.constant 0 : i32
    %c0_i32_0 = arith.constant 0 : i32
    %c0_i32_1 = arith.constant 0 : i32
    %c0_i32_2 = arith.constant 0 : i32
    return %arg0, %c0_i32, %c0_i32_0, %c0_i32_1 : i32, i32, i32, i32
  }
  func.func @transform_2(%arg0: i32) -> (i32, i32, i32, i32) {
    %c0_i32 = arith.constant 0 : i32
    %c0_i32_0 = arith.constant 0 : i32
    %c0_i32_1 = arith.constant 0 : i32
    %c0_i32_2 = arith.constant 0 : i32
    return %c0_i32, %arg0, %c0_i32_0, %c0_i32_1 : i32, i32, i32, i32
  }
}

</mosaic_0001>

<llo_original>
// kernel: tpu_custom_call.1
$region0: #{tpu_custom_call.1}
  #allocation0 [shape = 'u32[]', space=smem, size = 0x4, offset = 0x4, fixed_abs, tag = 'smem constant byte address 0x4 - core index']
  #allocation1 [shape = 'u32[72,128]{1,0:T(1,128)}', space=vmem, size = 0x9000, scoped, tag = 'internal scratch']
  #allocation8 [shape = 's32[]', space=sflag, size = 0x4, offset = 0, fixed_abs, tag = 'sflag constant byte address 0x0 - dummy sync flag']
  %s0 = inlined_call_operand.hbm [shape: f32[2,4,16,16], index: 0, kind: input, shape index: {}]
  %s1 = inlined_call_operand.hbm [shape: f32[3,4,16,16], index: 1, kind: input, shape index: {}]
  %s2 = inlined_call_operand.hbm [shape: f32[2,3,16,16], index: 2, kind: output, shape index: {}]
  %s3 = sld [smem:[#allocation0]]
  $region49: #{tpu_custom_call.1} parent=0
    _
  %s5 = ssub.s32 1, %s3
  %s6 = scalar_select 0, %s5, %s3
  $region1: #{tpu_custom_call.1} parent=0
    #allocation2 [shape = 'u8[65536]{0}', space=vmem, size = 0x10000, scoped, tag = 'input window, operand 0, single buffered']
    #allocation3 [shape = 's32[2]{0}', space=sflag, size = 0x8, scoped, tag = 'scoped memory for tpu_custom_call.1']
    #allocation4 [shape = 's32[2]{0}', space=sflag, size = 0x8, scoped, tag = 'scoped memory for tpu_custom_call.1']
    #allocation5 [shape = 'u8[65536]{0}', space=vmem, size = 0x10000, scoped, tag = 'input window, operand 1']
    #allocation6 [shape = 's32[2]{0}', space=sflag, size = 0x8, scoped, tag = 'scoped memory for tpu_custom_call.1']
    #allocation7 [shape = 'u8[32768]{0}', space=vmem, size = 0x8000, scoped, tag = 'output window, operand 0']
    %7 = vsyncpa [#allocation3], 0
    %8 = vsyncpa [#allocation6], 0
    %s9 = scalar_lea.sflag [#allocation6], 1
    %10 = vsyncpa %s9, 0
    %11 = vsyncpa [#allocation4], 0
    %s12 = scalar_lea.sflag [#allocation4], 1
    %13 = vsyncpa %s12, 0
    loop: start=0, step=1, limit=5
    $region2: #{tpu_custom_call.1} parent=1 // loop_pre_header
      _
    $region3: #{tpu_custom_call.1} parent=1 // loop_header
      %s15 = sphi 0, %s19
      %p16 = scmp.ge.s32.totalorder %s15, 5
      %s23 = sphi 0, %s23
      %s25 = sphi 0, %s23
      %s26 = sphi 0, %s25
      %s40 = sphi 0, %s26
      %s46 = sphi 0, %s48
      %s49 = sphi 0, %s46
      %s50 = sphi 0, %s49
      %s66 = sphi 0, %s50
      %s72 = sphi 0, %s74
      %s75 = sphi 0, %s72
      %s76 = sphi 0, %s75
      %s92 = sphi 0, %s76
    $region4: #{tpu_custom_call.1} parent=1 // loop_header_branch
      %18 = sbr.rel (%p16) target = $region8
    $region5: #{tpu_custom_call.1} parent=1 // loop_body
      %s20 = ssub.s32 %s15, 1
      %s21 = ssub.s32 %s15, 2
      %s22 = sadd.s32 %s15, 1
      %s24 = sadd.s32 %s23, 1
      %p27 = scmp.eq.s32.totalorder %s15, 2
      %p28 = scmp.ne.s32.totalorder %s23, %s25
      %p29 = scmp.eq.s32.totalorder %s15, 0
      %p30 = por %p28, %p29
      %p31 = scmp.ne.s32.totalorder %s23, %s25
      %p32 = scmp.eq.s32.totalorder %s20, 2
      %p33 = por %p31, %p32
      %p34 = scmp.ne.s32.totalorder %s25, %s26
      %p35 = scmp.eq.s32.totalorder %s20, 0
      %p36 = por %p34, %p35
      %p37 = scmp.ne.s32.totalorder %s25, %s26
      %p38 = scmp.eq.s32.totalorder %s21, 2
      %p39 = por %p37, %p38
      %p41 = scmp.ne.s32.totalorder %s26, %s40
      %p42 = scmp.eq.s32.totalorder %s21, 0
      %p43 = por %p41, %p42
      %s44 = ssub.s32 %s15, %s22
      %p45 = scmp.eq.s32.totalorder %s44, 0
      %s47 = sadd.s32 %s46, 1
      %s48 = scalar_select %p45, %s46, %s47
      %p51 = pneg %p45
      %p52 = scmp.eq.s32.totalorder %s15, 2
      %p53 = por %p51, %p52
      %p54 = scmp.ne.s32.totalorder %s46, %s49
      %p55 = scmp.eq.s32.totalorder %s15, 0
      %p56 = por %p54, %p55
      %p57 = scmp.ne.s32.totalorder %s46, %s49
      %p58 = scmp.eq.s32.totalorder %s20, 2
      %p59 = por %p57, %p58
      %p60 = scmp.ne.s32.totalorder %s49, %s50
      %p61 = scmp.eq.s32.totalorder %s20, 0
      %p62 = por %p60, %p61
      %p63 = scmp.ne.s32.totalorder %s49, %s50
      %p64 = scmp.eq.s32.totalorder %s21, 2
      %p65 = por %p63, %p64
      %p67 = scmp.ne.s32.totalorder %s50, %s66
      %p68 = scmp.eq.s32.totalorder %s21, 0
      %p69 = por %p67, %p68
      %s70 = ssub.s32 %s15, %s22
      %p71 = scmp.eq.s32.totalorder %s70, 0
      %s73 = sadd.s32 %s72, 1
      %s74 = scalar_select %p71, %s72, %s73
      %p77 = pneg %p71
      %p78 = scmp.eq.s32.totalorder %s15, 2
      %p79 = por %p77, %p78
      %p80 = scmp.ne.s32.totalorder %s72, %s75
      %p81 = scmp.eq.s32.totalorder %s15, 0
      %p82 = por %p80, %p81
      %p83 = scmp.ne.s32.totalorder %s72, %s75
      %p84 = scmp.eq.s32.totalorder %s20, 2
      %p85 = por %p83, %p84
      %p86 = scmp.ne.s32.totalorder %s75, %s76
      %p87 = scmp.eq.s32.totalorder %s20, 0
      %p88 = por %p86, %p87
      %p89 = scmp.ne.s32.totalorder %s75, %s76
      %p90 = scmp.eq.s32.totalorder %s21, 2
      %p91 = por %p89, %p90
      %p93 = scmp.ne.s32.totalorder %s76, %s92
      %p94 = scmp.eq.s32.totalorder %s21, 0
      %p95 = por %p93, %p94
      %p96 = scmp.le.s32.totalorder 1, %s15
      %p97 = scmp.lt.s32.totalorder %s15, 4
      %p98 = pnand %p96, %p97
      %p99 = pneg %p98
      // Predicated region
      $region9: #{tpu_custom_call.1} parent=5 // pred_check
        _
      $region10: #{tpu_custom_call.1} parent=5 // pred_check_branch
        %101 = sbr.rel (%p98) target = $region12
      $region11: #{tpu_custom_call.1} parent=5 // pred_region
        %s102 = ssub.s32 %s15, 1
        // Predicated region
        $region13: #{tpu_custom_call.1} parent=11 // pred_check
          %p103 = pneg %p36
        $region14: #{tpu_custom_call.1} parent=11 // pred_check_branch
          %105 = sbr.rel (%p103) target = $region16
        $region15: #{tpu_custom_call.1} parent=11 // pred_region
          %107 = vsyncadd [#allocation3], 0
          %s108 = sshll.u32 %s0, 4
          %s109 = int_to_ptr.hbm [resolvable:$true] %s108
          %s110 = sshll.u32 [#allocation2], 4
          %s111 = int_to_ptr.vmem [resolvable:$true] %s110
          %116 = dma.hbm_to_vmem [thread:$0]  %s109, 2048, %s111, [#allocation3], 128, 128, 8
        $region16: #{tpu_custom_call.1} parent=11 // pred_fallthru
          _
      $region12: #{tpu_custom_call.1} parent=5 // pred_fallthru
        _
      %p117 = scmp.lt.s32.totalorder %s15, 3
      // Predicated region
      $region17: #{tpu_custom_call.1} parent=5 // pred_check
        %p118 = pneg %p117
      $region18: #{tpu_custom_call.1} parent=5 // pred_check_branch
        %120 = sbr.rel (%p118) target = $region20
      $region19: #{tpu_custom_call.1} parent=5 // pred_region
        // Predicated region
        $region21: #{tpu_custom_call.1} parent=19 // pred_check
          %p121 = pneg %p56
        $region22: #{tpu_custom_call.1} parent=19 // pred_check_branch
          %123 = sbr.rel (%p121) target = $region24
        $region23: #{tpu_custom_call.1} parent=19 // pred_region
          %s124 = sand.u32 %s46, 1
          %s125 = scalar_lea.sflag [#allocation6], %s124
          %s126 = sand.u32 %s46, 1
          %s127 = smul.addr %s126, 64
          %s128 = scalar_lea.vmem [#allocation5], %s127
          %130 = vsyncadd %s125, 0
          %s131 = smul.addr %s15, 8
          %s132 = smul.addr %s131, 8
          %s133 = scalar_lea.hbm %s1, %s132
          %s134 = sshll.u32 %s133, 4
          %s135 = int_to_ptr.hbm [resolvable:$true] %s134
          %s136 = sshll.u32 %s128, 4
          %s137 = int_to_ptr.vmem [resolvable:$true] %s136
          %142 = dma.hbm_to_vmem [thread:$0]  %s135, 1024, %s137, %s125, 128, 128, 8
        $region24: #{tpu_custom_call.1} parent=19 // pred_fallthru
          _
      $region20: #{tpu_custom_call.1} parent=5 // pred_fallthru
        _
      %p143 = scmp.le.s32.totalorder 1, %s15
      %p144 = scmp.lt.s32.totalorder %s15, 4
      %p145 = pnand %p143, %p144
      %p146 = pneg %p145
      // Predicated region
      $region25: #{tpu_custom_call.1} parent=5 // pred_check
        _
      $region26: #{tpu_custom_call.1} parent=5 // pred_check_branch
        %148 = sbr.rel (%p145) target = $region28
      $region27: #{tpu_custom_call.1} parent=5 // pred_region
        %s149 = ssub.s32 %s15, 1
        // Predicated region
        $region29: #{tpu_custom_call.1} parent=27 // pred_check
          %p150 = pneg %p36
        $region30: #{tpu_custom_call.1} parent=27 // pred_check_branch
          %152 = sbr.rel (%p150) target = $region32
        $region31: #{tpu_custom_call.1} parent=27 // pred_region
          %154 = dma.done [#allocation3], 2048
        $region32: #{tpu_custom_call.1} parent=27 // pred_fallthru
          _
        %s155 = sand.u32 %s49, 1
        %s156 = scalar_lea.sflag [#allocation6], %s155
        %s157 = sand.u32 %s49, 1
        %s158 = smul.addr %s157, 64
        %s159 = scalar_lea.vmem [#allocation5], %s158
        // Predicated region
        $region33: #{tpu_custom_call.1} parent=27 // pred_check
          %p160 = pneg %p62
        $region34: #{tpu_custom_call.1} parent=27 // pred_check_branch
          %162 = sbr.rel (%p160) target = $region36
        $region35: #{tpu_custom_call.1} parent=27 // pred_region
          %164 = dma.done %s156, 1024
        $region36: #{tpu_custom_call.1} parent=27 // pred_fallthru
          _
        %p165 = pneg %p36
        %p166 = pneg %p33
        %s167 = sand.u32 %s49, 1
        %s168 = scalar_lea.sflag [#allocation6], %s167
        %s169 = sand.u32 %s49, 1
        %s170 = smul.addr %s169, 64
        %s171 = scalar_lea.vmem [#allocation5], %s170
        %p172 = pneg %p62
        %p173 = pneg %p59
        %p174 = pneg %p88
        %p175 = pneg %p85
        %s176 = sand.u32 %s75, 1
        %s177 = scalar_lea.sflag [#allocation4], %s176
        %s178 = sand.u32 %s75, 1
        %s179 = smul.addr %s178, 32
        %s180 = scalar_lea.vmem [#allocation7], %s179
        %v181 = vld [vmem:[%s159] sm:$0xff]
        %v182 = vld [vmem:[%s159 + $0x8] sm:$0xff]
        %v183 = vld [vmem:[%s159 + $0x10] sm:$0xff]
        %v184 = vld [vmem:[%s159 + $0x18] sm:$0xff]
        %v185 = vld [vmem:[%s159 + $0x20] sm:$0xff]
        %v186 = vld [vmem:[%s159 + $0x28] sm:$0xff]
        %v187 = vld [vmem:[%s159 + $0x30] sm:$0xff]
        %v188 = vld [vmem:[%s159 + $0x38] sm:$0xff]
        %v189 = vld [vmem:[#allocation2] sm:$0xff]
        %v190 = vld [vmem:[#allocation2 + $0x8] sm:$0xff]
        %v191 = vld [vmem:[#allocation2 + $0x10] sm:$0xff]
        %v192 = vld [vmem:[#allocation2 + $0x18] sm:$0xff]
        %v193 = vld [vmem:[#allocation2 + $0x20] sm:$0xff]
        %v194 = vld [vmem:[#allocation2 + $0x28] sm:$0xff]
        %v195 = vld [vmem:[#allocation2 + $0x30] sm:$0xff]
        %v196 = vld [vmem:[#allocation2 + $0x38] sm:$0xff]
        %vm197 = vcmask 130048
        %v199 = vsel %vm197, %v181, 0
        %v202 = vsel %vm197, %v182, 0
        %204 = vmatpush.msra.mxu0 0.0
        %205 = vmatpush.msra.mxu0 0.0
        %206 = vmatpush.msra.mxu0 0.0
        %207 = vmatpush.msra.mxu0 0.0
        %208 = vmatpush.msra.mxu0 0.0
        %209 = vmatpush.msra.mxu0 0.0
        %210 = vmatpush.msra.mxu0 0.0
        %211 = vmatpush.msra.mxu0 0.0
        %212 = vmatpush.msra.mxu0 0.0
        %213 = vmatpush.msra.mxu0 0.0
        %214 = vmatpush.msra.mxu0 0.0
        %215 = vmatpush.msra.mxu0 0.0
        %216 = vmatpush.msra.mxu0 0.0
        %217 = vmatpush.msra.mxu0 0.0
        %218 = vmatpush.msra.mxu0 %v190
        %219 = vmatpush.msra.mxu0 %v189
        %220 = vmatmul.f32.gmra.mxu0 %v199
        %v221 = vpop.f32.mrf.mxu0
        %v222 = vadd.f32 0.0, %v221
        %223 = vmatmul.f32.gmra.mxu0 %v202
        %v224 = vpop.f32.mrf.mxu0
        %v225 = vadd.f32 0.0, %v224
        %226 = vdwg.mxu0
        %v228 = vsel %vm197, %v183, 0
        %v231 = vsel %vm197, %v184, 0
        %233 = vmatpush.msra.mxu0 0.0
        %234 = vmatpush.msra.mxu0 0.0
        %235 = vmatpush.msra.mxu0 0.0
        %236 = vmatpush.msra.mxu0 0.0
        %237 = vmatpush.msra.mxu0 0.0
        %238 = vmatpush.msra.mxu0 0.0
        %239 = vmatpush.msra.mxu0 0.0
        %240 = vmatpush.msra.mxu0 0.0
        %241 = vmatpush.msra.mxu0 0.0
        %242 = vmatpush.msra.mxu0 0.0
        %243 = vmatpush.msra.mxu0 0.0
        %244 = vmatpush.msra.mxu0 0.0
        %245 = vmatpush.msra.mxu0 0.0
        %246 = vmatpush.msra.mxu0 0.0
        %247 = vmatpush.msra.mxu0 %v192
        %248 = vmatpush.msra.mxu0 %v191
        %249 = vmatmul.f32.gmra.mxu0 %v228
        %v250 = vpop.f32.mrf.mxu0
        %v251 = vadd.f32 0.0, %v250
        %252 = vmatmul.f32.gmra.mxu0 %v231
        %v253 = vpop.f32.mrf.mxu0
        %v254 = vadd.f32 0.0, %v253
        %255 = vdwg.mxu0
        %v257 = vsel %vm197, %v185, 0
        %v260 = vsel %vm197, %v186, 0
        %262 = vmatpush.msra.mxu0 0.0
        %263 = vmatpush.msra.mxu0 0.0
        %264 = vmatpush.msra.mxu0 0.0
        %265 = vmatpush.msra.mxu0 0.0
        %266 = vmatpush.msra.mxu0 0.0
        %267 = vmatpush.msra.mxu0 0.0
        %268 = vmatpush.msra.mxu0 0.0
        %269 = vmatpush.msra.mxu0 0.0
        %270 = vmatpush.msra.mxu0 0.0
        %271 = vmatpush.msra.mxu0 0.0
        %272 = vmatpush.msra.mxu0 0.0
        %273 = vmatpush.msra.mxu0 0.0
        %274 = vmatpush.msra.mxu0 0.0
        %275 = vmatpush.msra.mxu0 0.0
        %276 = vmatpush.msra.mxu0 %v194
        %277 = vmatpush.msra.mxu0 %v193
        %278 = vmatmul.f32.gmra.mxu0 %v257
        %v279 = vpop.f32.mrf.mxu0
        %v280 = vadd.f32 0.0, %v279
        %281 = vmatmul.f32.gmra.mxu0 %v260
        %v282 = vpop.f32.mrf.mxu0
        %v283 = vadd.f32 0.0, %v282
        %284 = vdwg.mxu0
        %v286 = vsel %vm197, %v187, 0
        %v289 = vsel %vm197, %v188, 0
        %291 = vmatpush.msra.mxu0 0.0
        %292 = vmatpush.msra.mxu0 0.0
        %293 = vmatpush.msra.mxu0 0.0
        %294 = vmatpush.msra.mxu0 0.0
        %295 = vmatpush.msra.mxu0 0.0
        %296 = vmatpush.msra.mxu0 0.0
        %297 = vmatpush.msra.mxu0 0.0
        %298 = vmatpush.msra.mxu0 0.0
        %299 = vmatpush.msra.mxu0 0.0
        %300 = vmatpush.msra.mxu0 0.0
        %301 = vmatpush.msra.mxu0 0.0
        %302 = vmatpush.msra.mxu0 0.0
        %303 = vmatpush.msra.mxu0 0.0
        %304 = vmatpush.msra.mxu0 0.0
        %305 = vmatpush.msra.mxu0 %v196
        %306 = vmatpush.msra.mxu0 %v195
        %307 = vmatmul.f32.gmra.mxu0 %v286
        %v308 = vpop.f32.mrf.mxu0
        %v309 = vadd.f32 0.0, %v308
        %310 = vmatmul.f32.gmra.mxu0 %v289
        %v311 = vpop.f32.mrf.mxu0
        %v312 = vadd.f32 0.0, %v311
        %313 = vdwg.mxu0
        %v315 = vsel %vm197, %v222, 0
        %v318 = vsel %vm197, %v225, 0
        %320 = vmatpush.xpose.msra.mxu0 0.0
        %321 = vmatpush.xpose.msra.mxu0 0.0
        %322 = vmatpush.xpose.msra.mxu0 0.0
        %323 = vmatpush.xpose.msra.mxu0 0.0
        %324 = vmatpush.xpose.msra.mxu0 0.0
        %325 = vmatpush.xpose.msra.mxu0 0.0
        %326 = vmatpush.xpose.msra.mxu0 0.0
        %327 = vmatpush.xpose.msra.mxu0 0.0
        %328 = vmatpush.xpose.msra.mxu0 0.0
        %329 = vmatpush.xpose.msra.mxu0 0.0
        %330 = vmatpush.xpose.msra.mxu0 0.0
        %331 = vmatpush.xpose.msra.mxu0 0.0
        %332 = vmatpush.xpose.msra.mxu0 0.0
        %333 = vmatpush.xpose.msra.mxu0 0.0
        %334 = vmatpush.xpose.msra.mxu0 %v202
        %335 = vmatpush.xpose.msra.mxu0 %v199
        %336 = vmatmul.f32.gmra.mxu0 %v315
        %v337 = vpop.f32.mrf.mxu0
        %v338 = vadd.f32 0.0, %v337
        %339 = vmatmul.f32.gmra.mxu0 %v318
        %v340 = vpop.f32.mrf.mxu0
        %v341 = vadd.f32 0.0, %v340
        %342 = vdwg.mxu0
        %v344 = vsel %vm197, %v251, 0
        %v347 = vsel %vm197, %v254, 0
        %349 = vmatpush.xpose.msra.mxu0 0.0
        %350 = vmatpush.xpose.msra.mxu0 0.0
        %351 = vmatpush.xpose.msra.mxu0 0.0
        %352 = vmatpush.xpose.msra.mxu0 0.0
        %353 = vmatpush.xpose.msra.mxu0 0.0
        %354 = vmatpush.xpose.msra.mxu0 0.0
        %355 = vmatpush.xpose.msra.mxu0 0.0
        %356 = vmatpush.xpose.msra.mxu0 0.0
        %357 = vmatpush.xpose.msra.mxu0 0.0
        %358 = vmatpush.xpose.msra.mxu0 0.0
        %359 = vmatpush.xpose.msra.mxu0 0.0
        %360 = vmatpush.xpose.msra.mxu0 0.0
        %361 = vmatpush.xpose.msra.mxu0 0.0
        %362 = vmatpush.xpose.msra.mxu0 0.0
        %363 = vmatpush.xpose.msra.mxu0 %v231
        %364 = vmatpush.xpose.msra.mxu0 %v228
        %365 = vmatmul.f32.gmra.mxu0 %v344
        %v366 = vpop.f32.mrf.mxu0
        %v367 = vadd.f32 0.0, %v366
        %368 = vmatmul.f32.gmra.mxu0 %v347
        %v369 = vpop.f32.mrf.mxu0
        %v370 = vadd.f32 0.0, %v369
        %371 = vdwg.mxu0
        %v373 = vsel %vm197, %v280, 0
        %v376 = vsel %vm197, %v283, 0
        %378 = vmatpush.xpose.msra.mxu0 0.0
        %379 = vmatpush.xpose.msra.mxu0 0.0
        %380 = vmatpush.xpose.msra.mxu0 0.0
        %381 = vmatpush.xpose.msra.mxu0 0.0
        %382 = vmatpush.xpose.msra.mxu0 0.0
        %383 = vmatpush.xpose.msra.mxu0 0.0
        %384 = vmatpush.xpose.msra.mxu0 0.0
        %385 = vmatpush.xpose.msra.mxu0 0.0
        %386 = vmatpush.xpose.msra.mxu0 0.0
        %387 = vmatpush.xpose.msra.mxu0 0.0
        %388 = vmatpush.xpose.msra.mxu0 0.0
        %389 = vmatpush.xpose.msra.mxu0 0.0
        %390 = vmatpush.xpose.msra.mxu0 0.0
        %391 = vmatpush.xpose.msra.mxu0 0.0
        %392 = vmatpush.xpose.msra.mxu0 %v260
        %393 = vmatpush.xpose.msra.mxu0 %v257
        %394 = vmatmul.f32.gmra.mxu0 %v373
        %v395 = vpop.f32.mrf.mxu0
        %v396 = vadd.f32 0.0, %v395
        %397 = vmatmul.f32.gmra.mxu0 %v376
        %v398 = vpop.f32.mrf.mxu0
        %v399 = vadd.f32 0.0, %v398
        %400 = vdwg.mxu0
        %v402 = vsel %vm197, %v309, 0
        %v405 = vsel %vm197, %v312, 0
        %407 = vmatpush.xpose.msra.mxu0 0.0
        %408 = vmatpush.xpose.msra.mxu0 0.0
        %409 = vmatpush.xpose.msra.mxu0 0.0
        %410 = vmatpush.xpose.msra.mxu0 0.0
        %411 = vmatpush.xpose.msra.mxu0 0.0
        %412 = vmatpush.xpose.msra.mxu0 0.0
        %413 = vmatpush.xpose.msra.mxu0 0.0
        %414 = vmatpush.xpose.msra.mxu0 0.0
        %415 = vmatpush.xpose.msra.mxu0 0.0
        %416 = vmatpush.xpose.msra.mxu0 0.0
        %417 = vmatpush.xpose.msra.mxu0 0.0
        %418 = vmatpush.xpose.msra.mxu0 0.0
        %419 = vmatpush.xpose.msra.mxu0 0.0
        %420 = vmatpush.xpose.msra.mxu0 0.0
        %421 = vmatpush.xpose.msra.mxu0 %v289
        %422 = vmatpush.xpose.msra.mxu0 %v286
        %423 = vmatmul.f32.gmra.mxu0 %v402
        %v424 = vpop.f32.mrf.mxu0
        %v425 = vadd.f32 0.0, %v424
        %426 = vmatmul.f32.gmra.mxu0 %v405
        %v427 = vpop.f32.mrf.mxu0
        %v428 = vadd.f32 0.0, %v427
        %429 = vdwg.mxu0
        %v430 = vsel %vm197, %v338, 0.0
        %v431 = vsel %vm197, %v367, 0.0
        %v432 = vadd.f32 %v430, %v431
        %v433 = vsel %vm197, %v396, 0.0
        %v434 = vadd.f32 %v432, %v433
        %v435 = vsel %vm197, %v425, 0.0
        %v436 = vadd.f32 %v434, %v435
        %v437 = vsel %vm197, %v341, 0.0
        %v438 = vsel %vm197, %v370, 0.0
        %v439 = vadd.f32 %v437, %v438
        %v440 = vsel %vm197, %v399, 0.0
        %v441 = vadd.f32 %v439, %v440
        %v442 = vsel %vm197, %v428, 0.0
        %v443 = vadd.f32 %v441, %v442
        %444 = vst.msk [vmem:[%s180] sm:$0xff] %vm197, %v436
        %445 = vst.msk [vmem:[%s180 + $0x8] sm:$0xff] %vm197, %v443
        %s446 = scalar_lea.vmem [#allocation2], 64
        %v447 = vld [vmem:[%s446] sm:$0xff]
        %v448 = vld [vmem:[%s446 + $0x8] sm:$0xff]
        %v449 = vld [vmem:[%s446 + $0x10] sm:$0xff]
        %v450 = vld [vmem:[%s446 + $0x18] sm:$0xff]
        %v451 = vld [vmem:[%s446 + $0x20] sm:$0xff]
        %v452 = vld [vmem:[%s446 + $0x28] sm:$0xff]
        %v453 = vld [vmem:[%s446 + $0x30] sm:$0xff]
        %v454 = vld [vmem:[%s446 + $0x38] sm:$0xff]
        %455 = vmatpush.msra.mxu0 0.0
        %456 = vmatpush.msra.mxu0 0.0
        %457 = vmatpush.msra.mxu0 0.0
        %458 = vmatpush.msra.mxu0 0.0
        %459 = vmatpush.msra.mxu0 0.0
        %460 = vmatpush.msra.mxu0 0.0
        %461 = vmatpush.msra.mxu0 0.0
        %462 = vmatpush.msra.mxu0 0.0
        %463 = vmatpush.msra.mxu0 0.0
        %464 = vmatpush.msra.mxu0 0.0
        %465 = vmatpush.msra.mxu0 0.0
        %466 = vmatpush.msra.mxu0 0.0
        %467 = vmatpush.msra.mxu0 0.0
        %468 = vmatpush.msra.mxu0 0.0
        %469 = vmatpush.msra.mxu0 %v448
        %470 = vmatpush.msra.mxu0 %v447
        %471 = vmatmul.f32.gmra.mxu0 %v199
        %v472 = vpop.f32.mrf.mxu0
        %v473 = vadd.f32 0.0, %v472
        %474 = vmatmul.f32.gmra.mxu0 %v202
        %v475 = vpop.f32.mrf.mxu0
        %v476 = vadd.f32 0.0, %v475
        %477 = vdwg.mxu0
        %478 = vmatpush.msra.mxu0 0.0
        %479 = vmatpush.msra.mxu0 0.0
        %480 = vmatpush.msra.mxu0 0.0
        %481 = vmatpush.msra.mxu0 0.0
        %482 = vmatpush.msra.mxu0 0.0
        %483 = vmatpush.msra.mxu0 0.0
        %484 = vmatpush.msra.mxu0 0.0
        %485 = vmatpush.msra.mxu0 0.0
        %486 = vmatpush.msra.mxu0 0.0
        %487 = vmatpush.msra.mxu0 0.0
        %488 = vmatpush.msra.mxu0 0.0
        %489 = vmatpush.msra.mxu0 0.0
        %490 = vmatpush.msra.mxu0 0.0
        %491 = vmatpush.msra.mxu0 0.0
        %492 = vmatpush.msra.mxu0 %v450
        %493 = vmatpush.msra.mxu0 %v449
        %494 = vmatmul.f32.gmra.mxu0 %v228
        %v495 = vpop.f32.mrf.mxu0
        %v496 = vadd.f32 0.0, %v495
        %497 = vmatmul.f32.gmra.mxu0 %v231
        %v498 = vpop.f32.mrf.mxu0
        %v499 = vadd.f32 0.0, %v498
        %500 = vdwg.mxu0
        %501 = vmatpush.msra.mxu0 0.0
        %502 = vmatpush.msra.mxu0 0.0
        %503 = vmatpush.msra.mxu0 0.0
        %504 = vmatpush.msra.mxu0 0.0
        %505 = vmatpush.msra.mxu0 0.0
        %506 = vmatpush.msra.mxu0 0.0
        %507 = vmatpush.msra.mxu0 0.0
        %508 = vmatpush.msra.mxu0 0.0
        %509 = vmatpush.msra.mxu0 0.0
        %510 = vmatpush.msra.mxu0 0.0
        %511 = vmatpush.msra.mxu0 0.0
        %512 = vmatpush.msra.mxu0 0.0
        %513 = vmatpush.msra.mxu0 0.0
        %514 = vmatpush.msra.mxu0 0.0
        %515 = vmatpush.msra.mxu0 %v452
        %516 = vmatpush.msra.mxu0 %v451
        %517 = vmatmul.f32.gmra.mxu0 %v257
        %v518 = vpop.f32.mrf.mxu0
        %v519 = vadd.f32 0.0, %v518
        %520 = vmatmul.f32.gmra.mxu0 %v260
        %v521 = vpop.f32.mrf.mxu0
        %v522 = vadd.f32 0.0, %v521
        %523 = vdwg.mxu0
        %524 = vmatpush.msra.mxu0 0.0
        %525 = vmatpush.msra.mxu0 0.0
        %526 = vmatpush.msra.mxu0 0.0
        %527 = vmatpush.msra.mxu0 0.0
        %528 = vmatpush.msra.mxu0 0.0
        %529 = vmatpush.msra.mxu0 0.0
        %530 = vmatpush.msra.mxu0 0.0
        %531 = vmatpush.msra.mxu0 0.0
        %532 = vmatpush.msra.mxu0 0.0
        %533 = vmatpush.msra.mxu0 0.0
        %534 = vmatpush.msra.mxu0 0.0
        %535 = vmatpush.msra.mxu0 0.0
        %536 = vmatpush.msra.mxu0 0.0
        %537 = vmatpush.msra.mxu0 0.0
        %538 = vmatpush.msra.mxu0 %v454
        %539 = vmatpush.msra.mxu0 %v453
        %540 = vmatmul.f32.gmra.mxu0 %v286
        %v541 = vpop.f32.mrf.mxu0
        %v542 = vadd.f32 0.0, %v541
        %543 = vmatmul.f32.gmra.mxu0 %v289
        %v544 = vpop.f32.mrf.mxu0
        %v545 = vadd.f32 0.0, %v544
        %546 = vdwg.mxu0
        %v548 = vsel %vm197, %v473, 0
        %v551 = vsel %vm197, %v476, 0
        %553 = vmatpush.xpose.msra.mxu0 0.0
        %554 = vmatpush.xpose.msra.mxu0 0.0
        %555 = vmatpush.xpose.msra.mxu0 0.0
        %556 = vmatpush.xpose.msra.mxu0 0.0
        %557 = vmatpush.xpose.msra.mxu0 0.0
        %558 = vmatpush.xpose.msra.mxu0 0.0
        %559 = vmatpush.xpose.msra.mxu0 0.0
        %560 = vmatpush.xpose.msra.mxu0 0.0
        %561 = vmatpush.xpose.msra.mxu0 0.0
        %562 = vmatpush.xpose.msra.mxu0 0.0
        %563 = vmatpush.xpose.msra.mxu0 0.0
        %564 = vmatpush.xpose.msra.mxu0 0.0
        %565 = vmatpush.xpose.msra.mxu0 0.0
        %566 = vmatpush.xpose.msra.mxu0 0.0
        %567 = vmatpush.xpose.msra.mxu0 %v202
        %568 = vmatpush.xpose.msra.mxu0 %v199
        %569 = vmatmul.f32.gmra.mxu0 %v548
        %v570 = vpop.f32.mrf.mxu0
        %v571 = vadd.f32 0.0, %v570
        %572 = vmatmul.f32.gmra.mxu0 %v551
        %v573 = vpop.f32.mrf.mxu0
        %v574 = vadd.f32 0.0, %v573
        %575 = vdwg.mxu0
        %v577 = vsel %vm197, %v496, 0
        %v580 = vsel %vm197, %v499, 0
        %582 = vmatpush.xpose.msra.mxu0 0.0
        %583 = vmatpush.xpose.msra.mxu0 0.0
        %584 = vmatpush.xpose.msra.mxu0 0.0
        %585 = vmatpush.xpose.msra.mxu0 0.0
        %586 = vmatpush.xpose.msra.mxu0 0.0
        %587 = vmatpush.xpose.msra.mxu0 0.0
        %588 = vmatpush.xpose.msra.mxu0 0.0
        %589 = vmatpush.xpose.msra.mxu0 0.0
        %590 = vmatpush.xpose.msra.mxu0 0.0
        %591 = vmatpush.xpose.msra.mxu0 0.0
        %592 = vmatpush.xpose.msra.mxu0 0.0
        %593 = vmatpush.xpose.msra.mxu0 0.0
        %594 = vmatpush.xpose.msra.mxu0 0.0
        %595 = vmatpush.xpose.msra.mxu0 0.0
        %596 = vmatpush.xpose.msra.mxu0 %v231
        %597 = vmatpush.xpose.msra.mxu0 %v228
        %598 = vmatmul.f32.gmra.mxu0 %v577
        %v599 = vpop.f32.mrf.mxu0
        %v600 = vadd.f32 0.0, %v599
        %601 = vmatmul.f32.gmra.mxu0 %v580
        %v602 = vpop.f32.mrf.mxu0
        %v603 = vadd.f32 0.0, %v602
        %604 = vdwg.mxu0
        %v606 = vsel %vm197, %v519, 0
        %v609 = vsel %vm197, %v522, 0
        %611 = vmatpush.xpose.msra.mxu0 0.0
        %612 = vmatpush.xpose.msra.mxu0 0.0
        %613 = vmatpush.xpose.msra.mxu0 0.0
        %614 = vmatpush.xpose.msra.mxu0 0.0
        %615 = vmatpush.xpose.msra.mxu0 0.0
        %616 = vmatpush.xpose.msra.mxu0 0.0
        %617 = vmatpush.xpose.msra.mxu0 0.0
        %618 = vmatpush.xpose.msra.mxu0 0.0
        %619 = vmatpush.xpose.msra.mxu0 0.0
        %620 = vmatpush.xpose.msra.mxu0 0.0
        %621 = vmatpush.xpose.msra.mxu0 0.0
        %622 = vmatpush.xpose.msra.mxu0 0.0
        %623 = vmatpush.xpose.msra.mxu0 0.0
        %624 = vmatpush.xpose.msra.mxu0 0.0
        %625 = vmatpush.xpose.msra.mxu0 %v260
        %626 = vmatpush.xpose.msra.mxu0 %v257
        %627 = vmatmul.f32.gmra.mxu0 %v606
        %v628 = vpop.f32.mrf.mxu0
        %v629 = vadd.f32 0.0, %v628
        %630 = vmatmul.f32.gmra.mxu0 %v609
        %v631 = vpop.f32.mrf.mxu0
        %v632 = vadd.f32 0.0, %v631
        %633 = vdwg.mxu0
        %v635 = vsel %vm197, %v542, 0
        %v638 = vsel %vm197, %v545, 0
        %640 = vmatpush.xpose.msra.mxu0 0.0
        %641 = vmatpush.xpose.msra.mxu0 0.0
        %642 = vmatpush.xpose.msra.mxu0 0.0
        %643 = vmatpush.xpose.msra.mxu0 0.0
        %644 = vmatpush.xpose.msra.mxu0 0.0
        %645 = vmatpush.xpose.msra.mxu0 0.0
        %646 = vmatpush.xpose.msra.mxu0 0.0
        %647 = vmatpush.xpose.msra.mxu0 0.0
        %648 = vmatpush.xpose.msra.mxu0 0.0
        %649 = vmatpush.xpose.msra.mxu0 0.0
        %650 = vmatpush.xpose.msra.mxu0 0.0
        %651 = vmatpush.xpose.msra.mxu0 0.0
        %652 = vmatpush.xpose.msra.mxu0 0.0
        %653 = vmatpush.xpose.msra.mxu0 0.0
        %654 = vmatpush.xpose.msra.mxu0 %v289
        %655 = vmatpush.xpose.msra.mxu0 %v286
        %656 = vmatmul.f32.gmra.mxu0 %v635
        %v657 = vpop.f32.mrf.mxu0
        %v658 = vadd.f32 0.0, %v657
        %659 = vmatmul.f32.gmra.mxu0 %v638
        %v660 = vpop.f32.mrf.mxu0
        %v661 = vadd.f32 0.0, %v660
        %662 = vdwg.mxu0
        %v663 = vsel %vm197, %v571, 0.0
        %v664 = vsel %vm197, %v600, 0.0
        %v665 = vadd.f32 %v663, %v664
        %v666 = vsel %vm197, %v629, 0.0
        %v667 = vadd.f32 %v665, %v666
        %v668 = vsel %vm197, %v658, 0.0
        %v669 = vadd.f32 %v667, %v668
        %v670 = vsel %vm197, %v574, 0.0
        %v671 = vsel %vm197, %v603, 0.0
        %v672 = vadd.f32 %v670, %v671
        %v673 = vsel %vm197, %v632, 0.0
        %v674 = vadd.f32 %v672, %v673
        %v675 = vsel %vm197, %v661, 0.0
        %v676 = vadd.f32 %v674, %v675
        %s677 = scalar_lea.vmem %s180, 16 [#allocation7]
        %678 = vst.msk [vmem:[%s677] sm:$0xff] %vm197, %v669
        %679 = vst.msk [vmem:[%s677 + $0x8] sm:$0xff] %vm197, %v676
        %s680 = sand.u32 %s75, 1
        %s681 = scalar_lea.sflag [#allocation4], %s680
        %s682 = sand.u32 %s75, 1
        %s683 = smul.addr %s682, 32
        %s684 = scalar_lea.vmem [#allocation7], %s683
        // Predicated region
        $region37: #{tpu_custom_call.1} parent=27 // pred_check
          %p685 = pneg %p85
        $region38: #{tpu_custom_call.1} parent=27 // pred_check_branch
          %687 = sbr.rel (%p685) target = $region40
        $region39: #{tpu_custom_call.1} parent=27 // pred_region
          #allocation9 [shape = 'u32[6]{0}', space=smem, size = 0x18, scoped, tag = 'DMA stride descriptor']
          %689 = vsyncadd %s681, 0
          %s690 = smul.addr %s20, 2
          %s691 = smul.addr %s690, 8
          %s692 = scalar_lea.hbm %s2, %s691
          %s694 = sshll.u32 1, 14
          %s695 = sxor.u32 4294967295, %s694
          %s698 = sshll.u32 7, 18
          %s699 = sxor.u32 4294967295, %s698
          %s700 = sand.u32 0, %s699
          %s702 = sor.u32 %s700, 0
          %s703 = sshll.u32 %s684, 4
          %s704 = int_to_ptr.vmem [resolvable:$true] %s703
          %s705 = sshll.u32 %s692, 4
          %s706 = int_to_ptr.hbm [resolvable:$true] %s705
          %712 = sst [smem:[#allocation9]] 256
          %s713 = scalar_lea.smem [#allocation9], 1
          %714 = sst [smem:[%s713]] 768
          %s715 = scalar_lea.smem [#allocation9], 2
          %716 = sst [smem:[%s715]] 2
          %s717 = scalar_lea.smem [#allocation9], 3
          %718 = sst [smem:[%s717]] 128
          %s719 = scalar_lea.smem [#allocation9], 4
          %720 = sst [smem:[%s719]] 128
          %s721 = scalar_lea.smem [#allocation9], 5
          %722 = sst [smem:[%s721]] 8
          %724 = dma.general %s704, 512, %s706, %s681, [#allocation8], [#allocation9], %s702, 0
        $region40: #{tpu_custom_call.1} parent=27 // pred_fallthru
          _
      $region28: #{tpu_custom_call.1} parent=5 // pred_fallthru
        _
      %p725 = scmp.le.s32.totalorder 2, %s15
      // Predicated region
      $region41: #{tpu_custom_call.1} parent=5 // pred_check
        %p726 = pneg %p725
      $region42: #{tpu_custom_call.1} parent=5 // pred_check_branch
        %728 = sbr.rel (%p726) target = $region44
      $region43: #{tpu_custom_call.1} parent=5 // pred_region
        %s729 = ssub.s32 %s15, 2
        // Predicated region
        $region45: #{tpu_custom_call.1} parent=43 // pred_check
          %p730 = pneg %p91
        $region46: #{tpu_custom_call.1} parent=43 // pred_check_branch
          %732 = sbr.rel (%p730) target = $region48
        $region47: #{tpu_custom_call.1} parent=43 // pred_region
          %s733 = sand.u32 %s76, 1
          %s734 = scalar_lea.sflag [#allocation4], %s733
          %s735 = sand.u32 %s76, 1
          %s736 = smul.addr %s735, 32
          %s737 = scalar_lea.vmem [#allocation7], %s736
          %739 = dma.done %s734, 512
        $region48: #{tpu_custom_call.1} parent=43 // pred_fallthru
          _
      $region44: #{tpu_custom_call.1} parent=5 // pred_fallthru
        _
    $region6: #{tpu_custom_call.1} parent=1 // loop_footer
      %s19 = sadd.s32 1, %s15
    $region7: #{tpu_custom_call.1} parent=1 // loop_footer_branch
      %14 = sbr.rel target = $region3
    $region8: #{tpu_custom_call.1} parent=1 // loop_exit
      _
    %740 = vsyncpa [#allocation3], 1
    %s741 = scalar_lea.sflag [#allocation3], 1
    %742 = vsyncpa %s741, 1
    %743 = vsyncpa [#allocation6], 1
    %s744 = scalar_lea.sflag [#allocation6], 1
    %745 = vsyncpa %s744, 1
    %746 = vsyncpa [#allocation4], 1
    %s747 = scalar_lea.sflag [#allocation4], 1
    %748 = vsyncpa %s747, 1

</llo_original>
